<compile_context>
chip_gen: v7x
topology: tpu7x:2x2x1
jax: 0.10.0
libtpu: 0.0.40
codegen_flags: <defaults>
</compile_context>

<pallas_src>
import functools

import jax
import jax.numpy as jnp
from jax.experimental import pallas as pl
from jax.experimental.pallas import tpu as pltpu


def _round_up(x, m):
    return ((x + m - 1) // m) * m


def _outconv_kernel(x_ref, w_ref, b_ref, o_ref, *, bn, c_in, c_out):
    """Unrolled per-pixel channel mix on full (R, 128) slabs.

    x_ref: (BN, C_in, R, 128)  VMEM
    w_ref: (C_out, C_in)       SMEM (f32 scalars)
    b_ref: (C_out,)            SMEM (f32 scalars)
    o_ref: (BN, C_out, R, 128) VMEM
    """
    # Hoist the scalar reads (read once per grid step, reused across BN images).
    wvals = [[w_ref[co, ci] for ci in range(c_in)] for co in range(c_out)]
    bvals = [b_ref[co] for co in range(c_out)]

    for bi in range(bn):
        xs = [x_ref[bi, ci].astype(jnp.float32) for ci in range(c_in)]  # (R,128) each
        for co in range(c_out):
            acc = wvals[co][0] * xs[0]
            for ci in range(1, c_in):
                acc = acc + wvals[co][ci] * xs[ci]
            o_ref[bi, co] = (acc + bvals[co]).astype(o_ref.dtype)


@jax.jit
def out_conv(x_nchw, weight, bias):
    """1x1 conv. x_nchw: (N, C_in, H, W); weight: (C_out, C_in, 1, 1); bias: (C_out,)."""
    N, C_in, H, W = x_nchw.shape
    C_out = weight.shape[0]
    HW = H * W
    out_dtype = x_nchw.dtype
    in_item = jnp.dtype(x_nchw.dtype).itemsize
    out_item = jnp.dtype(out_dtype).itemsize

    # ---- layout: channel-major, lane dim = 128 --------------------------------
    x3 = x_nchw.reshape(N, C_in, HW)
    HW_pad = _round_up(max(HW, 128), 128)
    if HW_pad != HW:
        # Rare path: one extra HBM pass to make the spatial axis a lane multiple.
        x3 = jnp.pad(x3, ((0, 0), (0, 0), (0, HW_pad - HW)))
    rows = HW_pad // 128
    x4 = x3.reshape(N, C_in, rows, 128)          # zero-cost when HW % 128 == 0

    w2 = weight.reshape(C_out, C_in).astype(jnp.float32)   # tiny scalar tables
    b1 = bias.reshape(C_out).astype(jnp.float32)

    # ---- generation-aware tile sizing (memory-bound op) -----------------------
    try:
        vmem_cap = int(pltpu.get_tpu_info().vmem_capacity_bytes)
    except Exception:  # conservative default if the query is unavailable
        vmem_cap = 64 << 20
    if vmem_cap <= (80 << 20):      # v7x-class: 64 MiB VMEM, 2 TCs share HBM
        step_target = 6 << 20       # per-TC per-step HBM traffic target
        tile_budget = 36 << 20      # double-buffered in+out tile budget
    else:                           # v5e / v6e: 128 MiB VMEM
        step_target = 4 << 20
        tile_budget = 80 << 20

    row_bytes = 128 * (C_in * in_item + C_out * out_item)     # in+out HBM per row
    target_rows = max(8, step_target // row_bytes)
    target_rows = min(target_rows, max(8, tile_budget // (2 * row_bytes)))

    if rows >= target_rows:
        # Big images: one image per step, large row tile (multiple of 8).
        bn = 1
        r_tile = max(8, (target_rows // 8) * 8)
    else:
        # Small images: whole image per step, block over batch to fatten the DMA.
        r_tile = rows                                # full extent -> valid block
        bn = min(N, max(1, target_rows // rows))
        bn = min(bn, max(1, (tile_budget // (2 * row_bytes)) // rows))
        while N % bn:                                # keep batch blocks exact
            bn -= 1

    # Keep >= 2 grid steps when possible so both v7x TensorCores get work.
    steps = pl.cdiv(N, bn) * pl.cdiv(rows, r_tile)
    if steps < 2:
        if N >= 2:
            bn = (N + 1) // 2
            while N % bn:
                bn -= 1
        elif rows >= 16:
            r_tile = max(8, ((rows // 2) // 8) * 8)

    grid = (N // bn, pl.cdiv(rows, r_tile))

    # ---- VMEM limit from actual usage (double-buffered in+out tiles) ----------
    tile_bytes = bn * r_tile * 128 * (C_in * in_item + C_out * out_item)
    vmem_limit = int(min(2 * tile_bytes + (8 << 20), vmem_cap - (8 << 20)))

    kernel = functools.partial(_outconv_kernel, bn=bn, c_in=C_in, c_out=C_out)

    y4 = pl.pallas_call(
        kernel,
        out_shape=jax.ShapeDtypeStruct((N, C_out, rows, 128), out_dtype),
        grid=grid,
        in_specs=[
            # x: BN images, all input channels, one lane-dense row tile.
            pl.BlockSpec((bn, C_in, r_tile, 128), lambda nb, i: (nb, 0, i, 0)),
            # weight / bias: whole (tiny) arrays resident in SMEM.
            pl.BlockSpec(memory_space=pltpu.MemorySpace.SMEM),
            pl.BlockSpec(memory_space=pltpu.MemorySpace.SMEM),
        ],
        out_specs=pl.BlockSpec((bn, C_out, r_tile, 128), lambda nb, i: (nb, 0, i, 0)),
        compiler_params=pltpu.CompilerParams(
            dimension_semantics=("parallel", "parallel"),
            vmem_limit_bytes=vmem_limit,
        ),
    )(x4, w2, b1)

    # Zero-cost reshapes back to NCHW (plus a slice if we padded).
    y3 = y4.reshape(N, C_out, HW_pad)
    if HW_pad != HW:
        y3 = y3[:, :, :HW]
    return y3.reshape(N, C_out, H, W)


if __name__ == "__main__":
    # Deterministic synthetic parameters matching nn.Conv2d(in, out, kernel_size=1).
    in_channels, out_channels = 4, 3
    N, H, W = 2, 16, 16

    key = jax.random.PRNGKey(0)
    kx, kw, kb = jax.random.split(key, 3)

    x = jax.random.normal(kx, (N, in_channels, H, W), dtype=jnp.float32)
    # PyTorch default Conv2d init: uniform(-1/sqrt(fan_in), 1/sqrt(fan_in)).
    bound = 1.0 / jnp.sqrt(jnp.float32(in_channels * 1 * 1))
    weight = jax.random.uniform(
        kw, (out_channels, in_channels, 1, 1), minval=-bound, maxval=bound,
        dtype=jnp.float32)
    bias = jax.random.uniform(
        kb, (out_channels,), minval=-bound, maxval=bound, dtype=jnp.float32)

    y = out_conv(x, weight, bias)
    y = jax.block_until_ready(y)

    # Reference: plain-JAX 1x1 conv (einsum over channels) + bias.
    y_ref = jnp.einsum("nchw,oc->nohw", x, weight.reshape(out_channels, in_channels))
    y_ref = y_ref + bias.reshape(1, out_channels, 1, 1)

    assert y.shape == (N, out_channels, H, W)
    assert jnp.allclose(y, y_ref, atol=1e-5, rtol=1e-5)

    print("KERNEL_OK")
</pallas_src>

<mosaic_0001>
module attributes {stable_mosaic.version = 11 : i64} {
  func.func @_outconv_kernel(%arg0: i32, %arg1: i32, %arg2: memref<1x4x2x128xf32, #tpu.memory_space<vmem>>, %arg3: memref<3x4xf32, #tpu.memory_space<smem>>, %arg4: memref<3xf32, #tpu.memory_space<smem>>, %arg5: memref<1x3x2x128xf32, #tpu.memory_space<vmem>>) attributes {dimension_semantics = [#tpu.dimension_semantics<parallel>, #tpu.dimension_semantics<parallel>], iteration_bounds = array<i64: 2, 1>, scalar_prefetch = 0 : i64, scratch_operands = 0 : i64, tpu.core_type = #tpu.core_type<tc>, window_params = [{transform_indices = @transform_0, window_bounds = array<i64: 1, 4, 2, 128>}, {transform_indices = @transform_1, window_bounds = array<i64: 3, 4>}, {transform_indices = @transform_2, window_bounds = array<i64: 3>}, {transform_indices = @transform_3, window_bounds = array<i64: 1, 3, 2, 128>}]} {
    %c0 = arith.constant 0 : index
    %c0_0 = arith.constant 0 : index
    %0 = memref.load %arg3[%c0, %c0_0] : memref<3x4xf32, #tpu.memory_space<smem>>
    %c0_1 = arith.constant 0 : index
    %c1 = arith.constant 1 : index
    %1 = memref.load %arg3[%c0_1, %c1] : memref<3x4xf32, #tpu.memory_space<smem>>
    %c0_2 = arith.constant 0 : index
    %c2 = arith.constant 2 : index
    %2 = memref.load %arg3[%c0_2, %c2] : memref<3x4xf32, #tpu.memory_space<smem>>
    %c0_3 = arith.constant 0 : index
    %c3 = arith.constant 3 : index
    %3 = memref.load %arg3[%c0_3, %c3] : memref<3x4xf32, #tpu.memory_space<smem>>
    %c1_4 = arith.constant 1 : index
    %c0_5 = arith.constant 0 : index
    %4 = memref.load %arg3[%c1_4, %c0_5] : memref<3x4xf32, #tpu.memory_space<smem>>
    %c1_6 = arith.constant 1 : index
    %c1_7 = arith.constant 1 : index
    %5 = memref.load %arg3[%c1_6, %c1_7] : memref<3x4xf32, #tpu.memory_space<smem>>
    %c1_8 = arith.constant 1 : index
    %c2_9 = arith.constant 2 : index
    %6 = memref.load %arg3[%c1_8, %c2_9] : memref<3x4xf32, #tpu.memory_space<smem>>
    %c1_10 = arith.constant 1 : index
    %c3_11 = arith.constant 3 : index
    %7 = memref.load %arg3[%c1_10, %c3_11] : memref<3x4xf32, #tpu.memory_space<smem>>
    %c2_12 = arith.constant 2 : index
    %c0_13 = arith.constant 0 : index
    %8 = memref.load %arg3[%c2_12, %c0_13] : memref<3x4xf32, #tpu.memory_space<smem>>
    %c2_14 = arith.constant 2 : index
    %c1_15 = arith.constant 1 : index
    %9 = memref.load %arg3[%c2_14, %c1_15] : memref<3x4xf32, #tpu.memory_space<smem>>
    %c2_16 = arith.constant 2 : index
    %c2_17 = arith.constant 2 : index
    %10 = memref.load %arg3[%c2_16, %c2_17] : memref<3x4xf32, #tpu.memory_space<smem>>
    %c2_18 = arith.constant 2 : index
    %c3_19 = arith.constant 3 : index
    %11 = memref.load %arg3[%c2_18, %c3_19] : memref<3x4xf32, #tpu.memory_space<smem>>
    %c0_20 = arith.constant 0 : index
    %12 = memref.load %arg4[%c0_20] : memref<3xf32, #tpu.memory_space<smem>>
    %c1_21 = arith.constant 1 : index
    %13 = memref.load %arg4[%c1_21] : memref<3xf32, #tpu.memory_space<smem>>
    %c2_22 = arith.constant 2 : index
    %14 = memref.load %arg4[%c2_22] : memref<3xf32, #tpu.memory_space<smem>>
    %c0_23 = arith.constant 0 : index
    %c0_24 = arith.constant 0 : index
    %c0_25 = arith.constant 0 : index
    %c0_26 = arith.constant 0 : index
    %15 = vector.load %arg2[%c0_23, %c0_24, %c0_25, %c0_26] : memref<1x4x2x128xf32, #tpu.memory_space<vmem>>, vector<1x1x2x128xf32>
    %16 = vector.shape_cast %15 : vector<1x1x2x128xf32> to vector<2x128xf32>
    %c0_27 = arith.constant 0 : index
    %c1_28 = arith.constant 1 : index
    %c0_29 = arith.constant 0 : index
    %c0_30 = arith.constant 0 : index
    %17 = vector.load %arg2[%c0_27, %c1_28, %c0_29, %c0_30] : memref<1x4x2x128xf32, #tpu.memory_space<vmem>>, vector<1x1x2x128xf32>
    %18 = vector.shape_cast %17 : vector<1x1x2x128xf32> to vector<2x128xf32>
    %c0_31 = arith.constant 0 : index
    %c2_32 = arith.constant 2 : index
    %c0_33 = arith.constant 0 : index
    %c0_34 = arith.constant 0 : index
    %19 = vector.load %arg2[%c0_31, %c2_32, %c0_33, %c0_34] : memref<1x4x2x128xf32, #tpu.memory_space<vmem>>, vector<1x1x2x128xf32>
    %20 = vector.shape_cast %19 : vector<1x1x2x128xf32> to vector<2x128xf32>
    %c0_35 = arith.constant 0 : index
    %c3_36 = arith.constant 3 : index
    %c0_37 = arith.constant 0 : index
    %c0_38 = arith.constant 0 : index
    %21 = vector.load %arg2[%c0_35, %c3_36, %c0_37, %c0_38] : memref<1x4x2x128xf32, #tpu.memory_space<vmem>>, vector<1x1x2x128xf32>
    %22 = vector.shape_cast %21 : vector<1x1x2x128xf32> to vector<2x128xf32>
    %23 = vector.broadcast %0 : f32 to vector<2x128xf32>
    %24 = arith.mulf %23, %16 : vector<2x128xf32>
    %25 = vector.broadcast %1 : f32 to vector<2x128xf32>
    %26 = arith.mulf %25, %18 : vector<2x128xf32>
    %27 = arith.addf %24, %26 : vector<2x128xf32>
    %28 = vector.broadcast %2 : f32 to vector<2x128xf32>
    %29 = arith.mulf %28, %20 : vector<2x128xf32>
    %30 = arith.addf %27, %29 : vector<2x128xf32>
    %31 = vector.broadcast %3 : f32 to vector<2x128xf32>
    %32 = arith.mulf %31, %22 : vector<2x128xf32>
    %33 = arith.addf %30, %32 : vector<2x128xf32>
    %34 = vector.broadcast %12 : f32 to vector<2x128xf32>
    %35 = arith.addf %33, %34 : vector<2x128xf32>
    %c0_39 = arith.constant 0 : index
    %c0_40 = arith.constant 0 : index
    %c0_41 = arith.constant 0 : index
    %c0_42 = arith.constant 0 : index
    %36 = vector.load %arg5[%c0_39, %c0_40, %c0_41, %c0_42] : memref<1x3x2x128xf32, #tpu.memory_space<vmem>>, vector<1x1x2x128xf32>
    %37 = vector.shape_cast %36 : vector<1x1x2x128xf32> to vector<2x128xf32>
    %38 = vector.shape_cast %35 : vector<2x128xf32> to vector<1x1x2x128xf32>
    tpu.vector_store %arg5[%c0_39, %c0_40, %c0_41, %c0_42], %38 {strides = array<i32>} : memref<1x3x2x128xf32, #tpu.memory_space<vmem>>, vector<1x1x2x128xf32>,
    %39 = vector.broadcast %4 : f32 to vector<2x128xf32>
    %40 = arith.mulf %39, %16 : vector<2x128xf32>
    %41 = vector.broadcast %5 : f32 to vector<2x128xf32>
    %42 = arith.mulf %41, %18 : vector<2x128xf32>
    %43 = arith.addf %40, %42 : vector<2x128xf32>
    %44 = vector.broadcast %6 : f32 to vector<2x128xf32>
    %45 = arith.mulf %44, %20 : vector<2x128xf32>
    %46 = arith.addf %43, %45 : vector<2x128xf32>
    %47 = vector.broadcast %7 : f32 to vector<2x128xf32>
    %48 = arith.mulf %47, %22 : vector<2x128xf32>
    %49 = arith.addf %46, %48 : vector<2x128xf32>
    %50 = vector.broadcast %13 : f32 to vector<2x128xf32>
    %51 = arith.addf %49, %50 : vector<2x128xf32>
    %c0_43 = arith.constant 0 : index
    %c1_44 = arith.constant 1 : index
    %c0_45 = arith.constant 0 : index
    %c0_46 = arith.constant 0 : index
    %52 = vector.load %arg5[%c0_43, %c1_44, %c0_45, %c0_46] : memref<1x3x2x128xf32, #tpu.memory_space<vmem>>, vector<1x1x2x128xf32>
    %53 = vector.shape_cast %52 : vector<1x1x2x128xf32> to vector<2x128xf32>
    %54 = vector.shape_cast %51 : vector<2x128xf32> to vector<1x1x2x128xf32>
    tpu.vector_store %arg5[%c0_43, %c1_44, %c0_45, %c0_46], %54 {strides = array<i32>} : memref<1x3x2x128xf32, #tpu.memory_space<vmem>>, vector<1x1x2x128xf32>,
    %55 = vector.broadcast %8 : f32 to vector<2x128xf32>
    %56 = arith.mulf %55, %16 : vector<2x128xf32>
    %57 = vector.broadcast %9 : f32 to vector<2x128xf32>
    %58 = arith.mulf %57, %18 : vector<2x128xf32>
    %59 = arith.addf %56, %58 : vector<2x128xf32>
    %60 = vector.broadcast %10 : f32 to vector<2x128xf32>
    %61 = arith.mulf %60, %20 : vector<2x128xf32>
    %62 = arith.addf %59, %61 : vector<2x128xf32>
    %63 = vector.broadcast %11 : f32 to vector<2x128xf32>
    %64 = arith.mulf %63, %22 : vector<2x128xf32>
    %65 = arith.addf %62, %64 : vector<2x128xf32>
    %66 = vector.broadcast %14 : f32 to vector<2x128xf32>
    %67 = arith.addf %65, %66 : vector<2x128xf32>
    %c0_47 = arith.constant 0 : index
    %c2_48 = arith.constant 2 : index
    %c0_49 = arith.constant 0 : index
    %c0_50 = arith.constant 0 : index
    %68 = vector.load %arg5[%c0_47, %c2_48, %c0_49, %c0_50] : memref<1x3x2x128xf32, #tpu.memory_space<vmem>>, vector<1x1x2x128xf32>
    %69 = vector.shape_cast %68 : vector<1x1x2x128xf32> to vector<2x128xf32>
    %70 = vector.shape_cast %67 : vector<2x128xf32> to vector<1x1x2x128xf32>
    tpu.vector_store %arg5[%c0_47, %c2_48, %c0_49, %c0_50], %70 {strides = array<i32>} : memref<1x3x2x128xf32, #tpu.memory_space<vmem>>, vector<1x1x2x128xf32>,
    return
  }
  func.func @transform_0(%arg0: i32, %arg1: i32) -> (i32, i32, i32, i32) {
    %c0_i32 = arith.constant 0 : i32
    %c0_i32_0 = arith.constant 0 : i32
    %c0_i32_1 = arith.constant 0 : i32
    return %arg0, %c0_i32, %arg1, %c0_i32_0 : i32, i32, i32, i32
  }
  func.func @transform_1(%arg0: i32, %arg1: i32) -> (i32, i32) {
    %c0_i32 = arith.constant 0 : i32
    %c0_i32_0 = arith.constant 0 : i32
    %c0_i32_1 = arith.constant 0 : i32
    return %c0_i32, %c0_i32_0 : i32, i32
  }
  func.func @transform_2(%arg0: i32, %arg1: i32) -> i32 {
    %c0_i32 = arith.constant 0 : i32
    %c0_i32_0 = arith.constant 0 : i32
    return %c0_i32 : i32
  }
  func.func @transform_3(%arg0: i32, %arg1: i32) -> (i32, i32, i32, i32) {
    %c0_i32 = arith.constant 0 : i32
    %c0_i32_0 = arith.constant 0 : i32
    %c0_i32_1 = arith.constant 0 : i32
    return %arg0, %c0_i32, %arg1, %c0_i32_0 : i32, i32, i32, i32
  }
}

</mosaic_0001>

<llo_original>
// kernel: out_conv.1
$region0: #{out_conv.1}
  #allocation0 [shape = 'u32[]', space=smem, size = 0x4, offset = 0x4, fixed_abs, tag = 'smem constant byte address 0x4 - core index']
  #allocation1 [shape = 'u32[144,128]{1,0:T(1,128)}', space=vmem, size = 0x12000, scoped, tag = 'internal scratch']
  %s0 = inlined_call_operand.vmem [shape: f32[2,4,2,128], index: 0, kind: input, shape index: {}]
  %s1 = inlined_call_operand.vmem [shape: f32[3,4], index: 1, kind: input, shape index: {}]
  %s2 = inlined_call_operand.vmem [shape: f32[3], index: 2, kind: input, shape index: {}]
  %s3 = inlined_call_operand.vmem [shape: f32[2,3,2,128], index: 3, kind: output, shape index: {}]
  %s4 = sld [smem:[#allocation0]]
  $region53: #{out_conv.1} parent=0
    _
  %s6 = ssub.s32 1, %s4
  %s7 = scalar_select 0, %s6, %s4
  $region1: #{out_conv.1} parent=0
    #allocation2 [shape = 'u8[2048]{0}', space=smem, size = 0x800, scoped, tag = 'input window, operand 1, single buffered']
    #allocation3 [shape = 's32[2]{0}', space=sflag, size = 0x8, scoped, tag = 'scoped memory for out_conv.1']
    #allocation4 [shape = 'u8[512]{0}', space=smem, size = 0x200, scoped, tag = 'input window, operand 2, single buffered']
    #allocation5 [shape = 's32[1]{0}', space=sflag, size = 0x4, scoped, tag = 'scoped memory for out_conv.1']
    %8 = vsyncpa [#allocation3], 0
    %9 = vsyncpa [#allocation5], 0
    loop: start=0, step=1, limit=4
    $region2: #{out_conv.1} parent=1 // loop_pre_header
      _
    $region3: #{out_conv.1} parent=1 // loop_header
      %s11 = sphi 0, %s15
      %p12 = scmp.ge.s32.totalorder %s11, 4
      %s18 = sphi 0, %s30
      %s19 = sphi 0, %s26
      %s20 = sphi 0, %s18
      %s21 = sphi 0, %s19
      %s22 = sphi 0, %s20
      %s23 = sphi 0, %s21
      %s35 = sphi 0, %s37
      %s38 = sphi 0, %s35
      %s39 = sphi 0, %s38
      %s55 = sphi 0, %s39
      %s59 = sphi 0, %s59
      %s61 = sphi 0, %s59
      %s62 = sphi 0, %s61
      %s76 = sphi 0, %s62
      %s80 = sphi 0, %s80
      %s82 = sphi 0, %s80
      %s83 = sphi 0, %s82
      %s97 = sphi 0, %s83
      %s105 = sphi 0, %s107
      %s108 = sphi 0, %s105
      %s109 = sphi 0, %s108
      %s125 = sphi 0, %s109
    $region4: #{out_conv.1} parent=1 // loop_header_branch
      %14 = sbr.rel (%p12) target = $region8
    $region5: #{out_conv.1} parent=1 // loop_body
      %s16 = ssub.s32 %s11, 1
      %s17 = ssub.s32 %s11, 2
      %s24 = sadd.s32 1, %s19
      %p25 = scmp.ge.s32.totalorder %s24, 1
      %s26 = scalar_select %p25, 0, %s24
      %s27 = sadd.s32 1, %s18
      %s28 = scalar_select %p25, %s27, %s18
      %p29 = scmp.ge.s32.totalorder %s28, 2
      %s30 = scalar_select %p29, 0, %s28
      %s31 = ssub.s32 %s18, %s30
      %s32 = ssub.s32 %s19, %s26
      %s33 = sor.u32 %s31, %s32
      %p34 = scmp.eq.s32.totalorder %s33, 0
      %s36 = sadd.s32 %s35, 1
      %s37 = scalar_select %p34, %s35, %s36
      %p40 = pneg %p34
      %p41 = scmp.eq.s32.totalorder %s11, 1
      %p42 = por %p40, %p41
      %p43 = scmp.ne.s32.totalorder %s35, %s38
      %p44 = scmp.eq.s32.totalorder %s11, 0
      %p45 = por %p43, %p44
      %p46 = scmp.ne.s32.totalorder %s35, %s38
      %p47 = scmp.eq.s32.totalorder %s16, 1
      %p48 = por %p46, %p47
      %p49 = scmp.ne.s32.totalorder %s38, %s39
      %p50 = scmp.eq.s32.totalorder %s16, 0
      %p51 = por %p49, %p50
      %p52 = scmp.ne.s32.totalorder %s38, %s39
      %p53 = scmp.eq.s32.totalorder %s17, 1
      %p54 = por %p52, %p53
      %p56 = scmp.ne.s32.totalorder %s39, %s55
      %p57 = scmp.eq.s32.totalorder %s17, 0
      %p58 = por %p56, %p57
      %s60 = sadd.s32 %s59, 1
      %p63 = scmp.eq.s32.totalorder %s11, 1
      %p64 = scmp.ne.s32.totalorder %s59, %s61
      %p65 = scmp.eq.s32.totalorder %s11, 0
      %p66 = por %p64, %p65
      %p67 = scmp.ne.s32.totalorder %s59, %s61
      %p68 = scmp.eq.s32.totalorder %s16, 1
      %p69 = por %p67, %p68
      %p70 = scmp.ne.s32.totalorder %s61, %s62
      %p71 = scmp.eq.s32.totalorder %s16, 0
      %p72 = por %p70, %p71
      %p73 = scmp.ne.s32.totalorder %s61, %s62
      %p74 = scmp.eq.s32.totalorder %s17, 1
      %p75 = por %p73, %p74
      %p77 = scmp.ne.s32.totalorder %s62, %s76
      %p78 = scmp.eq.s32.totalorder %s17, 0
      %p79 = por %p77, %p78
      %s81 = sadd.s32 %s80, 1
      %p84 = scmp.eq.s32.totalorder %s11, 1
      %p85 = scmp.ne.s32.totalorder %s80, %s82
      %p86 = scmp.eq.s32.totalorder %s11, 0
      %p87 = por %p85, %p86
      %p88 = scmp.ne.s32.totalorder %s80, %s82
      %p89 = scmp.eq.s32.totalorder %s16, 1
      %p90 = por %p88, %p89
      %p91 = scmp.ne.s32.totalorder %s82, %s83
      %p92 = scmp.eq.s32.totalorder %s16, 0
      %p93 = por %p91, %p92
      %p94 = scmp.ne.s32.totalorder %s82, %s83
      %p95 = scmp.eq.s32.totalorder %s17, 1
      %p96 = por %p94, %p95
      %p98 = scmp.ne.s32.totalorder %s83, %s97
      %p99 = scmp.eq.s32.totalorder %s17, 0
      %p100 = por %p98, %p99
      %s101 = ssub.s32 %s18, %s30
      %s102 = ssub.s32 %s19, %s26
      %s103 = sor.u32 %s101, %s102
      %p104 = scmp.eq.s32.totalorder %s103, 0
      %s106 = sadd.s32 %s105, 1
      %s107 = scalar_select %p104, %s105, %s106
      %p110 = pneg %p104
      %p111 = scmp.eq.s32.totalorder %s11, 1
      %p112 = por %p110, %p111
      %p113 = scmp.ne.s32.totalorder %s105, %s108
      %p114 = scmp.eq.s32.totalorder %s11, 0
      %p115 = por %p113, %p114
      %p116 = scmp.ne.s32.totalorder %s105, %s108
      %p117 = scmp.eq.s32.totalorder %s16, 1
      %p118 = por %p116, %p117
      %p119 = scmp.ne.s32.totalorder %s108, %s109
      %p120 = scmp.eq.s32.totalorder %s16, 0
      %p121 = por %p119, %p120
      %p122 = scmp.ne.s32.totalorder %s108, %s109
      %p123 = scmp.eq.s32.totalorder %s17, 1
      %p124 = por %p122, %p123
      %p126 = scmp.ne.s32.totalorder %s109, %s125
      %p127 = scmp.eq.s32.totalorder %s17, 0
      %p128 = por %p126, %p127
      %p129 = scmp.le.s32.totalorder 1, %s11
      %p130 = scmp.lt.s32.totalorder %s11, 3
      %p131 = pnand %p129, %p130
      %p132 = pneg %p131
      // Predicated region
      $region9: #{out_conv.1} parent=5 // pred_check
        _
      $region10: #{out_conv.1} parent=5 // pred_check_branch
        %134 = sbr.rel (%p131) target = $region12
      $region11: #{out_conv.1} parent=5 // pred_region
        %s135 = ssub.s32 %s11, 1
        // Predicated region
        $region13: #{out_conv.1} parent=11 // pred_check
          %p136 = pneg %p72
        $region14: #{out_conv.1} parent=11 // pred_check_branch
          %138 = sbr.rel (%p136) target = $region16
        $region15: #{out_conv.1} parent=11 // pred_region
          %s140 = ssub.s32 64, 64
          %141 = vsyncadd [#allocation3], %s140
          %s143 = sshll.u32 %s1, 4
          %s144 = int_to_ptr.vmem [resolvable:$true] %s143
          %146 = dma.vmem_to_smem %s144, 64, [#allocation2], [#allocation3]
        $region16: #{out_conv.1} parent=11 // pred_fallthru
          _
        // Predicated region
        $region17: #{out_conv.1} parent=11 // pred_check
          %p147 = pneg %p93
        $region18: #{out_conv.1} parent=11 // pred_check_branch
          %149 = sbr.rel (%p147) target = $region20
        $region19: #{out_conv.1} parent=11 // pred_region
          %s151 = ssub.s32 16, 16
          %152 = vsyncadd [#allocation5], %s151
          %s154 = sshll.u32 %s2, 4
          %s155 = int_to_ptr.vmem [resolvable:$true] %s154
          %157 = dma.vmem_to_smem %s155, 16, [#allocation4], [#allocation5]
        $region20: #{out_conv.1} parent=11 // pred_fallthru
          _
      $region12: #{out_conv.1} parent=5 // pred_fallthru
        _
      %p158 = scmp.lt.s32.totalorder %s11, 2
      // Predicated region
      $region21: #{out_conv.1} parent=5 // pred_check
        %p159 = pneg %p158
      $region22: #{out_conv.1} parent=5 // pred_check_branch
        %161 = sbr.rel (%p159) target = $region24
      $region23: #{out_conv.1} parent=5 // pred_region
        // Predicated region
        $region25: #{out_conv.1} parent=23 // pred_check
          %p162 = pneg %p45
        $region26: #{out_conv.1} parent=23 // pred_check_branch
          %164 = sbr.rel (%p162) target = $region28
        $region27: #{out_conv.1} parent=23 // pred_region
          %p165 = scmp.lt.s32.totalorder %s18, 1
          %s166 = scalar_select %p165, %s18, 1
          %p167 = scmp.lt.s32.totalorder %s19, 0
          %s168 = scalar_select %p167, %s19, 0
          %s169 = smul.addr %s166, 4
          %s170 = sadd.s32 %s168, %s169
          %s171 = smul.addr %s170, 2
          %s172 = scalar_lea.vmem %s0, %s171
        $region28: #{out_conv.1} parent=23 // pred_fallthru
          _
      $region24: #{out_conv.1} parent=5 // pred_fallthru
        _
      %p173 = scmp.le.s32.totalorder 1, %s11
      %p174 = scmp.lt.s32.totalorder %s11, 3
      %p175 = pnand %p173, %p174
      %p176 = pneg %p175
      // Predicated region
      $region29: #{out_conv.1} parent=5 // pred_check
        _
      $region30: #{out_conv.1} parent=5 // pred_check_branch
        %178 = sbr.rel (%p175) target = $region32
      $region31: #{out_conv.1} parent=5 // pred_region
        %s179 = ssub.s32 %s11, 1
        // Predicated region
        $region33: #{out_conv.1} parent=31 // pred_check
          %p180 = pneg %p72
        $region34: #{out_conv.1} parent=31 // pred_check_branch
          %182 = sbr.rel (%p180) target = $region36
        $region35: #{out_conv.1} parent=31 // pred_region
          %183 = dma.done [#allocation3], 64
        $region36: #{out_conv.1} parent=31 // pred_fallthru
          _
        // Predicated region
        $region37: #{out_conv.1} parent=31 // pred_check
          %p184 = pneg %p93
        $region38: #{out_conv.1} parent=31 // pred_check_branch
          %186 = sbr.rel (%p184) target = $region40
        $region39: #{out_conv.1} parent=31 // pred_region
          %187 = dma.done [#allocation5], 16
        $region40: #{out_conv.1} parent=31 // pred_fallthru
          _
        %188 = sfence
        %p189 = scmp.lt.s32.totalorder %s20, 1
        %s190 = scalar_select %p189, %s20, 1
        %p191 = scmp.lt.s32.totalorder %s21, 0
        %s192 = scalar_select %p191, %s21, 0
        %s193 = smul.addr %s190, 4
        %s194 = sadd.s32 %s192, %s193
        %s195 = smul.addr %s194, 2
        %s196 = scalar_lea.vmem %s0, %s195
        %p197 = pneg %p51
        %p198 = pneg %p48
        %p199 = pneg %p72
        %p200 = pneg %p69
        %p201 = pneg %p93
        %p202 = pneg %p90
        %p203 = pneg %p121
        %p204 = pneg %p118
        %p205 = scmp.lt.s32.totalorder %s20, 1
        %s206 = scalar_select %p205, %s20, 1
        %p207 = scmp.lt.s32.totalorder %s21, 0
        %s208 = scalar_select %p207, %s21, 0
        %s209 = smul.addr %s206, 3
        %s210 = sadd.s32 %s208, %s209
        %s211 = smul.addr %s210, 2
        %s212 = scalar_lea.vmem %s3, %s211
        %p213 = scmp.lt.s32.totalorder %s20, 1
        %s214 = scalar_select %p213, %s20, 1
        %p215 = scmp.lt.s32.totalorder %s21, 0
        %s216 = scalar_select %p215, %s21, 0
        %s217 = smul.addr %s214, 4
        %s218 = sadd.s32 %s216, %s217
        %s219 = smul.addr %s218, 2
        %s220 = scalar_lea.vmem %s0, %s219
        %p221 = scmp.lt.s32.totalorder %s20, 1
        %s222 = scalar_select %p221, %s20, 1
        %p223 = scmp.lt.s32.totalorder %s21, 0
        %s224 = scalar_select %p223, %s21, 0
        %s225 = smul.addr %s222, 3
        %s226 = sadd.s32 %s224, %s225
        %s227 = smul.addr %s226, 2
        %s228 = scalar_lea.vmem %s3, %s227
        %s229 = sld [smem:[#allocation2]]
        %s230 = sld [smem:[#allocation2 + $0x1]]
        %s231 = sld [smem:[#allocation2 + $0x2]]
        %s232 = sld [smem:[#allocation2 + $0x3]]
        %s233 = sld [smem:[#allocation2 + $0x80]]
        %s234 = sld [smem:[#allocation2 + $0x81]]
        %s235 = sld [smem:[#allocation2 + $0x82]]
        %s236 = sld [smem:[#allocation2 + $0x83]]
        %s237 = sld [smem:[#allocation2 + $0x100]]
        %s238 = sld [smem:[#allocation2 + $0x101]]
        %s239 = sld [smem:[#allocation2 + $0x102]]
        %s240 = sld [smem:[#allocation2 + $0x103]]
        %s241 = sld [smem:[#allocation4]]
        %s242 = sld [smem:[#allocation4 + $0x1]]
        %s243 = sld [smem:[#allocation4 + $0x2]]
        %v244 = vld [vmem:[%s220] sm:$0x3]
        %s245 = scalar_lea.vmem %s220, 2
        %v246 = vld [vmem:[%s245] sm:$0x3]
        %s247 = scalar_lea.vmem %s220, 4
        %v248 = vld [vmem:[%s247] sm:$0x3]
        %s249 = scalar_lea.vmem %s220, 6
        %v250 = vld [vmem:[%s249] sm:$0x3]
        %v251 = vstv %s229
        %v252 = vmul.f32 %v251, %v244
        %v253 = vstv %s230
        %v254 = vmul.f32 %v253, %v246
        %v255 = vadd.f32 %v252, %v254
        %v256 = vstv %s231
        %v257 = vmul.f32 %v256, %v248
        %v258 = vadd.f32 %v255, %v257
        %v259 = vstv %s232
        %v260 = vmul.f32 %v259, %v250
        %v261 = vadd.f32 %v258, %v260
        %v262 = vstv %s241
        %v263 = vadd.f32 %v261, %v262
        %264 = vst [vmem:[%s228] sm:$0x3] %v263
        %v265 = vstv %s233
        %v266 = vmul.f32 %v265, %v244
        %v267 = vstv %s234
        %v268 = vmul.f32 %v267, %v246
        %v269 = vadd.f32 %v266, %v268
        %v270 = vstv %s235
        %v271 = vmul.f32 %v270, %v248
        %v272 = vadd.f32 %v269, %v271
        %v273 = vstv %s236
        %v274 = vmul.f32 %v273, %v250
        %v275 = vadd.f32 %v272, %v274
        %v276 = vstv %s242
        %v277 = vadd.f32 %v275, %v276
        %s278 = scalar_lea.vmem %s228, 2
        %279 = vst [vmem:[%s278] sm:$0x3] %v277
        %v280 = vstv %s237
        %v281 = vmul.f32 %v280, %v244
        %v282 = vstv %s238
        %v283 = vmul.f32 %v282, %v246
        %v284 = vadd.f32 %v281, %v283
        %v285 = vstv %s239
        %v286 = vmul.f32 %v285, %v248
        %v287 = vadd.f32 %v284, %v286
        %v288 = vstv %s240
        %v289 = vmul.f32 %v288, %v250
        %v290 = vadd.f32 %v287, %v289
        %v291 = vstv %s243
        %v292 = vadd.f32 %v290, %v291
        %s293 = scalar_lea.vmem %s228, 4
        %294 = vst [vmem:[%s293] sm:$0x3] %v292
        %p295 = scmp.lt.s32.totalorder %s20, 1
        %s296 = scalar_select %p295, %s20, 1
        %p297 = scmp.lt.s32.totalorder %s21, 0
        %s298 = scalar_select %p297, %s21, 0
        %s299 = smul.addr %s296, 3
        %s300 = sadd.s32 %s298, %s299
        %s301 = smul.addr %s300, 2
        %s302 = scalar_lea.vmem %s3, %s301
        // Predicated region
        $region41: #{out_conv.1} parent=31 // pred_check
          %p303 = pneg %p118
        $region42: #{out_conv.1} parent=31 // pred_check_branch
          %305 = sbr.rel (%p303) target = $region44
        $region43: #{out_conv.1} parent=31 // pred_region
          _
        $region44: #{out_conv.1} parent=31 // pred_fallthru
          _
      $region32: #{out_conv.1} parent=5 // pred_fallthru
        _
      %p306 = scmp.le.s32.totalorder 2, %s11
      // Predicated region
      $region45: #{out_conv.1} parent=5 // pred_check
        %p307 = pneg %p306
      $region46: #{out_conv.1} parent=5 // pred_check_branch
        %309 = sbr.rel (%p307) target = $region48
      $region47: #{out_conv.1} parent=5 // pred_region
        %s310 = ssub.s32 %s11, 2
        // Predicated region
        $region49: #{out_conv.1} parent=47 // pred_check
          %p311 = pneg %p124
        $region50: #{out_conv.1} parent=47 // pred_check_branch
          %313 = sbr.rel (%p311) target = $region52
        $region51: #{out_conv.1} parent=47 // pred_region
          %p314 = scmp.lt.s32.totalorder %s22, 1
          %s315 = scalar_select %p314, %s22, 1
          %p316 = scmp.lt.s32.totalorder %s23, 0
          %s317 = scalar_select %p316, %s23, 0
          %s318 = smul.addr %s315, 3
          %s319 = sadd.s32 %s317, %s318
          %s320 = smul.addr %s319, 2
          %s321 = scalar_lea.vmem %s3, %s320
        $region52: #{out_conv.1} parent=47 // pred_fallthru
          _
      $region48: #{out_conv.1} parent=5 // pred_fallthru
        _
    $region6: #{out_conv.1} parent=1 // loop_footer
      %s15 = sadd.s32 1, %s11
    $region7: #{out_conv.1} parent=1 // loop_footer_branch
      %10 = sbr.rel target = $region3
    $region8: #{out_conv.1} parent=1 // loop_exit
      _
    %322 = vsyncpa [#allocation3], 1
    %s323 = scalar_lea.sflag [#allocation3], 1
    %324 = vsyncpa %s323, 1
    %325 = vsyncpa [#allocation5], 1

</llo_original>
